<compile_context>
chip_gen: v7x
topology: tpu7x:2x2x1
jax: 0.10.0
libtpu: 0.0.40
codegen_flags: <defaults>
</compile_context>

<pallas_src>
import jax
import jax.numpy as jnp
from jax.experimental import pallas as pl
from jax.experimental.pallas import tpu as pltpu


def _make_radix_softmax_kernel(radix, cardinality, r):
    """Kernel over a (TB, N) tile, N = cardinality * radix * r (natural NCHW
    flatten order).  Softmax over the radix axis; output written in torch's
    view -> transpose(1,2) -> reshape order, i.e. (radix, cardinality, r)."""
    M = cardinality * r

    def kernel(x_ref, o_ref):
        for c in range(cardinality):
            in_base = c * radix * r
            # Each radix slice is a dense (TB, r) 2-D tile: TB on sublanes,
            # r on lanes.  Reductions across radix are elementwise VPU ops.
            xs = [
                x_ref[:, in_base + j * r: in_base + (j + 1) * r].astype(jnp.float32)
                for j in range(radix)
            ]
            if radix == 2:
                # softmax over 2 elements == sigmoid of the difference.
                e = jnp.exp(xs[1] - xs[0])
                p0 = pl.reciprocal(1.0 + e, approx=False)
                ys = [p0, 1.0 - p0]
            else:
                m = xs[0]
                for j in range(1, radix):
                    m = jnp.maximum(m, xs[j])
                es = [jnp.exp(xj - m) for xj in xs]
                s = es[0]
                for j in range(1, radix):
                    s = s + es[j]
                inv = pl.reciprocal(s, approx=False)
                ys = [ej * inv for ej in es]
            for j in range(radix):
                o_ref[:, j * M + c * r: j * M + (c + 1) * r] = ys[j].astype(o_ref.dtype)

    return kernel


def _sigmoid_kernel(x_ref, o_ref):
    x = x_ref[...].astype(jnp.float32)
    o_ref[...] = pl.reciprocal(1.0 + jnp.exp(-x), approx=False).astype(o_ref.dtype)


def _pick_batch_tile(batch, row_bytes, target_bytes=2 << 20):
    """~target_bytes per input tile.  Keeps the second-to-last block dim legal
    (multiple of 8, or equal to the full batch) and prefers >= 2 grid steps
    when the batch is large enough (v7x dual TensorCores)."""
    tb = max(1, target_bytes // max(row_bytes, 1))
    if tb >= batch:
        if batch >= 16:
            return ((batch // 2 + 7) // 8) * 8
        return batch
    if batch <= 8:
        return batch
    return max(8, (tb // 8) * 8)


def radix_softmax(x, radix, cardinality):
    """Forward pass of RadixSoftmax.

    x: (B, C, H, W) array (NCHW, same as PyTorch).
    Returns (B, C*H*W) if radix > 1 else (B, C, H, W) (matching torch).
    """
    batch = x.shape[0]
    n = 1
    for d in x.shape[1:]:
        n *= d

    x_flat = x.reshape(batch, n)  # contiguous reshape: no HBM pass
    row_bytes = n * x_flat.dtype.itemsize
    tb = _pick_batch_tile(batch, row_bytes)
    grid = (pl.cdiv(batch, tb),)

    if radix > 1:
        assert n % (radix * cardinality) == 0
        r = n // (radix * cardinality)
        kernel = _make_radix_softmax_kernel(radix, cardinality, r)
        out = pl.pallas_call(
            kernel,
            out_shape=jax.ShapeDtypeStruct((batch, n), x.dtype),
            grid=grid,
            in_specs=[pl.BlockSpec((tb, n), lambda b: (b, 0))],
            out_specs=pl.BlockSpec((tb, n), lambda b: (b, 0)),
            compiler_params=pltpu.CompilerParams(
                dimension_semantics=("parallel",)),
        )(x_flat)
        # Already flattened in torch's (radix, cardinality, r) order.
        return out
    else:
        out = pl.pallas_call(
            _sigmoid_kernel,
            out_shape=jax.ShapeDtypeStruct((batch, n), x.dtype),
            grid=grid,
            in_specs=[pl.BlockSpec((tb, n), lambda b: (b, 0))],
            out_specs=pl.BlockSpec((tb, n), lambda b: (b, 0)),
            compiler_params=pltpu.CompilerParams(
                dimension_semantics=("parallel",)),
        )(x_flat)
        return out.reshape(x.shape)


def _reference_radix_softmax(x, radix, cardinality):
    batch = x.shape[0]
    if radix > 1:
        xr = x.reshape(batch, cardinality, radix, -1)
        xr = jnp.transpose(xr, (0, 2, 1, 3))
        xr = jax.nn.softmax(xr, axis=1)
        return xr.reshape(batch, -1)
    else:
        return jax.nn.sigmoid(x)


if __name__ == "__main__":
    key = jax.random.PRNGKey(0)

    # Typical RadixSoftmax input: output of the attention fc -> (B, C, 1, 1)
    radix, cardinality = 2, 2
    B, C, H, W = 2, 32, 1, 1
    x = jax.random.normal(key, (B, C, H, W), dtype=jnp.float32)

    out = jax.block_until_ready(radix_softmax(x, radix, cardinality))
    ref = _reference_radix_softmax(x, radix, cardinality)
    assert out.shape == ref.shape, (out.shape, ref.shape)
    assert jnp.allclose(out, ref, atol=1e-5, rtol=1e-5)

    # radix == 1 (sigmoid) branch.
    out1 = jax.block_until_ready(radix_softmax(x, 1, cardinality))
    ref1 = _reference_radix_softmax(x, 1, cardinality)
    assert out1.shape == ref1.shape
    assert jnp.allclose(out1, ref1, atol=1e-5, rtol=1e-5)

    # General radix (> 2) path with a multi-step (parallel) batch grid.
    x3 = jax.random.normal(jax.random.PRNGKey(0), (16, 64, 1, 1), dtype=jnp.float32)
    out3 = jax.block_until_ready(radix_softmax(x3, 4, 1))
    ref3 = _reference_radix_softmax(x3, 4, 1)
    assert out3.shape == ref3.shape
    assert jnp.allclose(out3, ref3, atol=1e-5, rtol=1e-5)

    print("KERNEL_OK")
</pallas_src>

<mosaic_0001>
module attributes {stable_mosaic.version = 11 : i64} {
  func.func @kernel(%arg0: i32, %arg1: memref<2x32xf32, #tpu.memory_space<vmem>>, %arg2: memref<2x32xf32, #tpu.memory_space<vmem>>) attributes {dimension_semantics = [#tpu.dimension_semantics<parallel>], iteration_bounds = array<i64: 1>, scalar_prefetch = 0 : i64, scratch_operands = 0 : i64, tpu.core_type = #tpu.core_type<tc>, window_params = [{transform_indices = @transform_0, window_bounds = array<i64: 2, 32>}, {transform_indices = @transform_1, window_bounds = array<i64: 2, 32>}]} {
    %c0 = arith.constant 0 : index
    %c0_0 = arith.constant 0 : index
    %0 = vector.load %arg1[%c0, %c0_0] : memref<2x32xf32, #tpu.memory_space<vmem>>, vector<2x8xf32>
    %c0_1 = arith.constant 0 : index
    %c8 = arith.constant 8 : index
    %1 = vector.load %arg1[%c0_1, %c8] : memref<2x32xf32, #tpu.memory_space<vmem>>, vector<2x8xf32>
    %2 = arith.subf %1, %0 : vector<2x8xf32>
    %3 = math.exp %2 : vector<2x8xf32>
    %cst = arith.constant 1.000000e+00 : f32
    %4 = vector.broadcast %cst : f32 to vector<2x8xf32>
    %5 = arith.addf %4, %3 : vector<2x8xf32>
    %6 = tpu.reciprocal %5 : vector<2x8xf32> -> vector<2x8xf32>
    %cst_2 = arith.constant 1.000000e+00 : f32
    %7 = vector.broadcast %cst_2 : f32 to vector<2x8xf32>
    %8 = arith.subf %7, %6 : vector<2x8xf32>
    %c0_3 = arith.constant 0 : index
    %c0_4 = arith.constant 0 : index
    %9 = vector.load %arg2[%c0_3, %c0_4] : memref<2x32xf32, #tpu.memory_space<vmem>>, vector<2x8xf32>
    tpu.vector_store %arg2[%c0_3, %c0_4], %6 {strides = array<i32>} : memref<2x32xf32, #tpu.memory_space<vmem>>, vector<2x8xf32>,
    %c0_5 = arith.constant 0 : index
    %c16 = arith.constant 16 : index
    %10 = vector.load %arg2[%c0_5, %c16] : memref<2x32xf32, #tpu.memory_space<vmem>>, vector<2x8xf32>
    tpu.vector_store %arg2[%c0_5, %c16], %8 {strides = array<i32>} : memref<2x32xf32, #tpu.memory_space<vmem>>, vector<2x8xf32>,
    %c0_6 = arith.constant 0 : index
    %c16_7 = arith.constant 16 : index
    %11 = vector.load %arg1[%c0_6, %c16_7] : memref<2x32xf32, #tpu.memory_space<vmem>>, vector<2x8xf32>
    %c0_8 = arith.constant 0 : index
    %c24 = arith.constant 24 : index
    %12 = vector.load %arg1[%c0_8, %c24] : memref<2x32xf32, #tpu.memory_space<vmem>>, vector<2x8xf32>
    %13 = arith.subf %12, %11 : vector<2x8xf32>
    %14 = math.exp %13 : vector<2x8xf32>
    %cst_9 = arith.constant 1.000000e+00 : f32
    %15 = vector.broadcast %cst_9 : f32 to vector<2x8xf32>
    %16 = arith.addf %15, %14 : vector<2x8xf32>
    %17 = tpu.reciprocal %16 : vector<2x8xf32> -> vector<2x8xf32>
    %cst_10 = arith.constant 1.000000e+00 : f32
    %18 = vector.broadcast %cst_10 : f32 to vector<2x8xf32>
    %19 = arith.subf %18, %17 : vector<2x8xf32>
    %c0_11 = arith.constant 0 : index
    %c8_12 = arith.constant 8 : index
    %20 = vector.load %arg2[%c0_11, %c8_12] : memref<2x32xf32, #tpu.memory_space<vmem>>, vector<2x8xf32>
    tpu.vector_store %arg2[%c0_11, %c8_12], %17 {strides = array<i32>} : memref<2x32xf32, #tpu.memory_space<vmem>>, vector<2x8xf32>,
    %c0_13 = arith.constant 0 : index
    %c24_14 = arith.constant 24 : index
    %21 = vector.load %arg2[%c0_13, %c24_14] : memref<2x32xf32, #tpu.memory_space<vmem>>, vector<2x8xf32>
    tpu.vector_store %arg2[%c0_13, %c24_14], %19 {strides = array<i32>} : memref<2x32xf32, #tpu.memory_space<vmem>>, vector<2x8xf32>,
    return
  }
  func.func @transform_0(%arg0: i32) -> (i32, i32) {
    %c0_i32 = arith.constant 0 : i32
    %c0_i32_0 = arith.constant 0 : i32
    return %arg0, %c0_i32 : i32, i32
  }
  func.func @transform_1(%arg0: i32) -> (i32, i32) {
    %c0_i32 = arith.constant 0 : i32
    %c0_i32_0 = arith.constant 0 : i32
    return %arg0, %c0_i32 : i32, i32
  }
}

</mosaic_0001>

<llo_original>
// kernel: tpu_custom_call.1
$region0: #{tpu_custom_call.1}
  #allocation0 [shape = 'u32[]', space=smem, size = 0x4, offset = 0x4, fixed_abs, tag = 'smem constant byte address 0x4 - core index']
  #allocation1 [shape = 'u32[144,128]{1,0:T(1,128)}', space=vmem, size = 0x12000, scoped, tag = 'internal scratch']
  %s0 = inlined_call_operand.hbm [shape: f32[2,32], index: 0, kind: input, shape index: {}]
  %s1 = inlined_call_operand.hbm [shape: f32[2,32], index: 1, kind: output, shape index: {}]
  %s2 = sld [smem:[#allocation0]]
  $region18: #{tpu_custom_call.1} parent=0
    _
  %s4 = ssub.s32 1, %s2
  %s5 = scalar_select 0, %s4, %s2
  $region1: #{tpu_custom_call.1} parent=0
    #allocation2 [shape = 'u8[1024]{0}', space=vmem, size = 0x400, scoped, tag = 'input window, operand 0, single buffered']
    #allocation3 [shape = 's32[1]{0}', space=sflag, size = 0x4, scoped, tag = 'scoped memory for tpu_custom_call.1']
    #allocation4 [shape = 's32[1]{0}', space=sflag, size = 0x4, scoped, tag = 'scoped memory for tpu_custom_call.1']
    #allocation5 [shape = 'u8[1024]{0}', space=vmem, size = 0x400, scoped, tag = 'output window, operand 0, single buffered']
    %6 = vsyncpa [#allocation3], 0
    %7 = vsyncpa [#allocation4], 0
    // Predicated region
    $region2: #{tpu_custom_call.1} parent=1 // pred_check
      _
    $region3: #{tpu_custom_call.1} parent=1 // pred_check_branch
      %9 = sbr.rel (0) target = $region5
    $region4: #{tpu_custom_call.1} parent=1 // pred_region
      %s11 = ssub.s32 32, 32
      %12 = vsyncadd [#allocation3], %s11
      %s14 = sshll.u32 [#allocation2], 4
      %s15 = int_to_ptr.vmem [resolvable:$true] %s14
      %17 = dma.hbm_to_vmem [thread:$0]  %s0, 32, %s15, [#allocation3]
    $region5: #{tpu_custom_call.1} parent=1 // pred_fallthru
      _
    // Predicated region
    $region6: #{tpu_custom_call.1} parent=1 // pred_check
      _
    $region7: #{tpu_custom_call.1} parent=1 // pred_check_branch
      %19 = sbr.rel (0) target = $region9
    $region8: #{tpu_custom_call.1} parent=1 // pred_region
      %20 = dma.done [#allocation3], 32
    $region9: #{tpu_custom_call.1} parent=1 // pred_fallthru
      _
    %v21 = vld [vmem:[#allocation2] sm:$0x3]
    %23 = vrot.lane.b32.xlu0 %v21, 8
    %v24 = vpop.permute.xlu0 %23
    %v26 = vsub.f32 %v21, %v24
    %v27 = vmul.f32 %v26, 1.442695
    %v28 = vpow.pop %v27
    %v29 = vadd.f32 %v28, 1.0
    %v30 = vrcp.pop %v29
    %v31 = vsub.f32 1.0, %v30
    %33 = vrot.lane.b32.xlu0 %v30, 120
    %v34 = vpop.permute.xlu0 %33
    %vm36 = vcmask 58368
    %37 = vst.msk [vmem:[#allocation5] sm:$0x3] %vm36, %v34
    %39 = vrot.lane.b32.xlu0 %v31, 8
    %v40 = vpop.permute.xlu0 %39
    %vm42 = vcmask 189568
    %43 = vst.msk [vmem:[#allocation5] sm:$0x3] %vm42, %v40
    %v44 = vld [vmem:[#allocation2] sm:$0x3]
    %46 = vrot.lane.b32.xlu0 %v44, 8
    %v47 = vpop.permute.xlu0 %46
    %v49 = vsub.f32 %v44, %v47
    %v50 = vmul.f32 %v49, 1.442695
    %v51 = vpow.pop %v50
    %v52 = vadd.f32 %v51, 1.0
    %v53 = vrcp.pop %v52
    %v54 = vsub.f32 1.0, %v53
    %56 = vrot.lane.b32.xlu0 %v53, 112
    %v57 = vpop.permute.xlu0 %56
    %vm59 = vcmask 123968
    %60 = vst.msk [vmem:[#allocation5] sm:$0x3] %vm59, %v57
    %vm61 = vcmask 255168
    %62 = vst.msk [vmem:[#allocation5] sm:$0x3] %vm61, %v54
    // Predicated region
    $region10: #{tpu_custom_call.1} parent=1 // pred_check
      _
    $region11: #{tpu_custom_call.1} parent=1 // pred_check_branch
      %64 = sbr.rel (0) target = $region13
    $region12: #{tpu_custom_call.1} parent=1 // pred_region
      %s66 = ssub.s32 32, 32
      %67 = vsyncadd [#allocation4], %s66
      %s69 = sshll.u32 [#allocation5], 4
      %s70 = int_to_ptr.vmem [resolvable:$true] %s69
      %72 = dma.vmem_to_hbm [thread:$0]  %s70, 32, %s1, [#allocation4]
    $region13: #{tpu_custom_call.1} parent=1 // pred_fallthru
      _
    // Predicated region
    $region14: #{tpu_custom_call.1} parent=1 // pred_check
      _
    $region15: #{tpu_custom_call.1} parent=1 // pred_check_branch
      %74 = sbr.rel (0) target = $region17
    $region16: #{tpu_custom_call.1} parent=1 // pred_region
      %75 = dma.done [#allocation4], 32
    $region17: #{tpu_custom_call.1} parent=1 // pred_fallthru
      _
    %76 = vsyncpa [#allocation3], 1
    %77 = vsyncpa [#allocation4], 1

</llo_original>
